<compile_context>
chip_gen: v7x
topology: tpu7x:2x2x1
jax: 0.10.0
libtpu: 0.0.40
codegen_flags: <defaults>
</compile_context>

<pallas_src>
import jax
import jax.numpy as jnp
from jax.experimental import pallas as pl
from jax.experimental.pallas import tpu as pltpu


# ---------------------------------------------------------------------------
# Kernel
# ---------------------------------------------------------------------------
def _resblock_kernel(alpha_ref,                 # SMEM (2,) PReLU alphas
                     x_ref,                     # (TB, F) activation tile
                     w1_ref, c1_ref,            # folded fc1+bn1: (F, F) bf16, (1, F) f32
                     w2_ref, c2_ref,            # folded fc2+bn2
                     o_ref):                    # (TB, F) output tile
    a1 = alpha_ref[0]
    a2 = alpha_ref[1]

    # fc1 + bn1 (running stats folded into weight columns / bias constant).
    # Stream x straight into the matmul dtype (no-op when x is already bf16),
    # accumulate in f32 on the MXU.
    h = jnp.dot(x_ref[...].astype(w1_ref.dtype), w1_ref[...],
                preferred_element_type=jnp.float32) + c1_ref[...]
    # prelu1 (single scalar alpha); drop1 is identity in eval mode
    h = jnp.where(h > 0, h, a1 * h)

    # fc2 + bn2 (folded)
    h2 = jnp.dot(h.astype(w2_ref.dtype), w2_ref[...],
                 preferred_element_type=jnp.float32) + c2_ref[...]
    # Residual add: re-read the x tile here (it is already resident in the
    # input VMEM buffer) instead of keeping an f32 copy live across both
    # matmuls — avoids vreg spills at large batch tiles.
    h2 = h2 + x_ref[...].astype(jnp.float32)
    # prelu2; drop2 identity in eval mode
    o_ref[...] = jnp.where(h2 > 0, h2, a2 * h2).astype(o_ref.dtype)


# ---------------------------------------------------------------------------
# Wrapper
# ---------------------------------------------------------------------------
def _round_up(n, m):
    return ((n + m - 1) // m) * m


_HAS_BUFFERED = hasattr(pl, "Buffered")


def _const_spec(shape, single_buffer):
    """BlockSpec for a grid-constant operand (index_map never changes)."""
    index_map = lambda i: (0,) * len(shape)
    if single_buffer:
        # Halves the operand's VMEM residency; only attempted when supported
        # and when the footprint is large enough to matter (see caller).
        return pl.BlockSpec(shape, index_map,
                            pipeline_mode=pl.Buffered(buffer_count=1))
    return pl.BlockSpec(shape, index_map)


def _build_call(B_pad, F, tile_b, out_dtype, single_buffer_consts,
                vmem_limit_bytes):
    act_spec = pl.BlockSpec((tile_b, F), lambda i: (i, 0))
    smem_spec = pl.BlockSpec(memory_space=pltpu.MemorySpace.SMEM)
    return pl.pallas_call(
        _resblock_kernel,
        out_shape=jax.ShapeDtypeStruct((B_pad, F), out_dtype),
        grid_spec=pltpu.PrefetchScalarGridSpec(
            num_scalar_prefetch=0,
            grid=(B_pad // tile_b,),
            in_specs=[
                smem_spec,                                    # alphas (2,)
                act_spec,                                     # x tile
                _const_spec((F, F), single_buffer_consts),    # W1' (bn1 folded)
                _const_spec((1, F), single_buffer_consts),    # c1
                _const_spec((F, F), single_buffer_consts),    # W2' (bn2 folded)
                _const_spec((1, F), single_buffer_consts),    # c2
            ],
            out_specs=act_spec,
        ),
        compiler_params=pltpu.CompilerParams(
            dimension_semantics=("parallel",),
            vmem_limit_bytes=vmem_limit_bytes,
        ),
    )


def _vmem_cap_bytes():
    """Generation-aware VMEM ceiling: ~85% of physical VMEM (v5e/v6e: 128 MiB,
    v7x: 64 MiB), leaving headroom for Mosaic internal scratch."""
    phys = None
    try:
        phys = getattr(pltpu.get_tpu_info(), "vmem_capacity_bytes", None)
    except Exception:
        phys = None   # hardware query unavailable (e.g. interpret mode)
    if not phys:
        phys = 64 * 1024 * 1024   # conservative: smallest-VMEM generation (v7x)
    return int(0.85 * phys)


def residual_block(x, params, *, tile_b=512):
    """x: (B, F) float32 or bfloat16 activations. params: folded parameters
    from make_params(). Returns the same dtype as x."""
    B, F = x.shape

    # Largest batch tile <= tile_b that is a multiple of 8, but keep >= 2 grid
    # steps whenever the batch can be split: the batch axis is 'parallel' and
    # v7x shards it across its 2 TensorCores.
    eff_tile = min(tile_b, _round_up(B, 8))
    if B >= 16:
        eff_tile = min(eff_tile, _round_up((B + 1) // 2, 8))
    B_pad = _round_up(B, eff_tile)
    x_in = x if B_pad == B else jnp.pad(x, ((0, B_pad - B), (0, 0)))
    # NOTE: padded rows are fully computed and discarded (harmless numerically).

    w_itemsize = jnp.dtype(params["w1"].dtype).itemsize
    act_itemsize = jnp.dtype(x.dtype).itemsize
    w_bytes = 2 * F * F * w_itemsize + 2 * F * 4          # weights + folded biases
    act_bytes = 2 * eff_tile * F * act_itemsize           # in tile + out tile
    # Worst case: everything double-buffered; 2x safety margin, 32 MiB floor
    # (raises the 16 MiB v5e default scoped limit), generation-aware ceiling.
    needed = 2 * (w_bytes + act_bytes)
    vmem_limit = int(min(max(2 * needed, 32 * 1024 * 1024), _vmem_cap_bytes()))

    args = (params["alphas"], x_in,
            params["w1"], params["c1"], params["w2"], params["c2"])

    # Single-buffer the grid-constant weights only when their footprint is big
    # enough to matter; the fallback is explicit and narrow — only build-time
    # Pallas errors are caught, never Mosaic/XLA runtime errors (VMEM OOM).
    single_consts = _HAS_BUFFERED and w_bytes >= (4 << 20)
    if single_consts:
        try:
            out = _build_call(B_pad, F, eff_tile, x.dtype, True,
                              vmem_limit)(*args)
        except (TypeError, ValueError, NotImplementedError,
                pltpu.LoweringException):
            # pl.Buffered(1) rejected by this JAX build's pipeline; rebuild
            # with default double buffering (identical numerics).
            out = _build_call(B_pad, F, eff_tile, x.dtype, False,
                              vmem_limit)(*args)
    else:
        out = _build_call(B_pad, F, eff_tile, x.dtype, False,
                          vmem_limit)(*args)

    return out[:B] if B_pad != B else out


# ---------------------------------------------------------------------------
# Parameters (synthetic, deterministic) + references
# ---------------------------------------------------------------------------
def make_params(key, F, eps=1e-5, weight_dtype=jnp.bfloat16):
    """Synthetic parameters matching the PyTorch module shapes, with eval-mode
    BatchNorm folded into the Linear weights/biases. Also returns the raw
    (un-folded, f32) parameters for an exact-math reference."""
    ks = jax.random.split(key, 12)
    # nn.Linear weights are (out, in); transpose for the x @ W layout.
    w1 = jax.random.normal(ks[0], (F, F), jnp.float32) * 0.05
    b1 = jax.random.normal(ks[1], (F,), jnp.float32) * 0.05
    w2 = jax.random.normal(ks[2], (F, F), jnp.float32) * 0.05
    b2 = jax.random.normal(ks[3], (F,), jnp.float32) * 0.05
    # BatchNorm1d params + running stats (eval mode).
    g1 = 1.0 + 0.1 * jax.random.normal(ks[4], (F,), jnp.float32)
    be1 = 0.1 * jax.random.normal(ks[5], (F,), jnp.float32)
    rm1 = 0.1 * jax.random.normal(ks[6], (F,), jnp.float32)
    rv1 = jax.random.uniform(ks[7], (F,), jnp.float32, minval=0.5, maxval=1.5)
    g2 = 1.0 + 0.1 * jax.random.normal(ks[8], (F,), jnp.float32)
    be2 = 0.1 * jax.random.normal(ks[9], (F,), jnp.float32)
    rm2 = 0.1 * jax.random.normal(ks[10], (F,), jnp.float32)
    rv2 = jax.random.uniform(ks[11], (F,), jnp.float32, minval=0.5, maxval=1.5)

    scale1 = g1 / jnp.sqrt(rv1 + eps)
    shift1 = be1 - rm1 * scale1
    scale2 = g2 / jnp.sqrt(rv2 + eps)
    shift2 = be2 - rm2 * scale2

    # Fold BN into the linear layers:  bn(x@Wt + b) = x@(Wt*scale) + (b*scale+shift)
    folded = {
        "w1": (w1.T * scale1[None, :]).astype(weight_dtype),
        "c1": (b1 * scale1 + shift1).reshape(1, F).astype(jnp.float32),
        "w2": (w2.T * scale2[None, :]).astype(weight_dtype),
        "c2": (b2 * scale2 + shift2).reshape(1, F).astype(jnp.float32),
        # PReLU default init alpha = 0.25 (num_parameters=1), both layers.
        "alphas": jnp.array([0.25, 0.25], jnp.float32),
    }
    raw = {"w1": w1, "b1": b1, "w2": w2, "b2": b2,
           "g1": g1, "be1": be1, "rm1": rm1, "rv1": rv1,
           "g2": g2, "be2": be2, "rm2": rm2, "rv2": rv2,
           "eps": eps, "alpha1": 0.25, "alpha2": 0.25}
    return folded, raw


def residual_block_ref(x, p):
    """Pure-JAX reference following the same folded / bf16-weight path."""
    a1, a2 = p["alphas"][0], p["alphas"][1]
    h = jnp.dot(x.astype(p["w1"].dtype), p["w1"],
                preferred_element_type=jnp.float32) + p["c1"]
    h = jnp.where(h > 0, h, a1 * h)
    h2 = jnp.dot(h.astype(p["w2"].dtype), p["w2"],
                 preferred_element_type=jnp.float32) + p["c2"]
    h2 = h2 + x.astype(jnp.float32)
    return jnp.where(h2 > 0, h2, a2 * h2).astype(x.dtype)


def residual_block_ref_f32(x, raw):
    """Un-folded, full-f32 reference matching the PyTorch module in eval mode
    (bounds bf16 quantization error, not just path parity)."""
    def bn(h, g, b, m, v):
        return (h - m) / jnp.sqrt(v + raw["eps"]) * g + b

    def prelu(h, a):
        return jnp.where(h > 0, h, a * h)

    h = x @ raw["w1"].T + raw["b1"]
    h = prelu(bn(h, raw["g1"], raw["be1"], raw["rm1"], raw["rv1"]), raw["alpha1"])
    h = h @ raw["w2"].T + raw["b2"]
    h = bn(h, raw["g2"], raw["be2"], raw["rm2"], raw["rv2"]) + x
    return prelu(h, raw["alpha2"])


# ---------------------------------------------------------------------------
if __name__ == "__main__":
    key = jax.random.PRNGKey(0)
    k_x, k_x2, k_x3, k_p = jax.random.split(key, 4)

    F = 128
    params, raw = make_params(k_p, F)

    # Main case: 2-step 'parallel' batch grid (keeps both v7x TensorCores
    # busy) with full 128-row MXU tiles.
    B = 256
    x = jax.random.normal(k_x, (B, F), jnp.float32)
    out = jax.block_until_ready(residual_block(x, params))
    assert out.shape == x.shape and out.dtype == x.dtype
    ref = residual_block_ref(x, params)
    assert jnp.allclose(out, ref, atol=1e-2, rtol=1e-2), "mismatch vs folded ref"
    ref32 = residual_block_ref_f32(x, raw)
    assert jnp.allclose(out, ref32, atol=5e-2, rtol=5e-2), "mismatch vs f32 ref"

    # Ragged batch: exercises padding + the keep-two-grid-steps tiling.
    B2 = 20
    x2 = jax.random.normal(k_x2, (B2, F), jnp.float32)
    out2 = jax.block_until_ready(residual_block(x2, params))
    assert out2.shape == x2.shape
    assert jnp.allclose(out2, residual_block_ref(x2, params),
                        atol=1e-2, rtol=1e-2), "mismatch (ragged batch)"

    # bf16 activations: the kernel streams them directly (halves activation
    # HBM traffic on v5e/v6e); PReLU / residual / accumulation stay f32.
    B3 = 64
    x3 = jax.random.normal(k_x3, (B3, F), jnp.float32).astype(jnp.bfloat16)
    out3 = jax.block_until_ready(residual_block(x3, params))
    assert out3.shape == x3.shape and out3.dtype == jnp.bfloat16
    ref3 = residual_block_ref(x3, params)
    assert jnp.allclose(out3.astype(jnp.float32), ref3.astype(jnp.float32),
                        atol=1e-1, rtol=1e-1), "mismatch (bf16 activations)"

    print("KERNEL_OK")
</pallas_src>

<mosaic_0001>
module attributes {stable_mosaic.version = 11 : i64} {
  func.func @_resblock_kernel(%arg0: i32, %arg1: memref<2xf32, #tpu.memory_space<smem>>, %arg2: memref<128x128xf32, #tpu.memory_space<vmem>>, %arg3: memref<128x128xbf16, #tpu.memory_space<vmem>>, %arg4: memref<1x128xf32, #tpu.memory_space<vmem>>, %arg5: memref<128x128xbf16, #tpu.memory_space<vmem>>, %arg6: memref<1x128xf32, #tpu.memory_space<vmem>>, %arg7: memref<128x128xf32, #tpu.memory_space<vmem>>) attributes {dimension_semantics = [#tpu.dimension_semantics<parallel>], iteration_bounds = array<i64: 2>, scalar_prefetch = 0 : i64, scratch_operands = 0 : i64, tpu.core_type = #tpu.core_type<tc>, window_params = [{transform_indices = @transform_0, window_bounds = array<i64: 2>}, {transform_indices = @transform_1, window_bounds = array<i64: 128, 128>}, {pipeline_mode = #tpu.pipeline_mode<synchronous>, transform_indices = @transform_2, window_bounds = array<i64: 128, 128>}, {pipeline_mode = #tpu.pipeline_mode<synchronous>, transform_indices = @transform_3, window_bounds = array<i64: 1, 128>}, {pipeline_mode = #tpu.pipeline_mode<synchronous>, transform_indices = @transform_4, window_bounds = array<i64: 128, 128>}, {pipeline_mode = #tpu.pipeline_mode<synchronous>, transform_indices = @transform_5, window_bounds = array<i64: 1, 128>}, {transform_indices = @transform_6, window_bounds = array<i64: 128, 128>}]} {
    %c0 = arith.constant 0 : index
    %0 = memref.load %arg1[%c0] : memref<2xf32, #tpu.memory_space<smem>>
    %c1 = arith.constant 1 : index
    %1 = memref.load %arg1[%c1] : memref<2xf32, #tpu.memory_space<smem>>
    %c0_0 = arith.constant 0 : index
    %c0_1 = arith.constant 0 : index
    %2 = vector.load %arg2[%c0_0, %c0_1] : memref<128x128xf32, #tpu.memory_space<vmem>>, vector<128x128xf32>
    %3 = arith.truncf %2 : vector<128x128xf32> to vector<128x128xbf16>
    %c0_2 = arith.constant 0 : index
    %c0_3 = arith.constant 0 : index
    %4 = vector.load %arg3[%c0_2, %c0_3] : memref<128x128xbf16, #tpu.memory_space<vmem>>, vector<128x128xbf16>
    %cst = arith.constant dense<0.000000e+00> : vector<128x128xf32>
    %5 = tpu.matmul %3, %4, %cst {dimension_numbers = #tpu.dot_dimension_numbers<[1], [0], [0], [1], [0, 0, 1, 1], [], []>} : vector<128x128xbf16>, vector<128x128xbf16>, vector<128x128xf32> -> vector<128x128xf32>
    %c0_4 = arith.constant 0 : index
    %c0_5 = arith.constant 0 : index
    %6 = vector.load %arg4[%c0_4, %c0_5] : memref<1x128xf32, #tpu.memory_space<vmem>>, vector<1x128xf32>
    %7 = vector.broadcast %6 : vector<1x128xf32> to vector<128x128xf32>
    %8 = arith.addf %5, %7 : vector<128x128xf32>
    %cst_6 = arith.constant 0.000000e+00 : f32
    %9 = vector.broadcast %cst_6 : f32 to vector<128x128xf32>
    %10 = arith.cmpf ogt, %8, %9 : vector<128x128xf32>
    %11 = vector.broadcast %0 : f32 to vector<128x128xf32>
    %12 = arith.mulf %11, %8 : vector<128x128xf32>
    %13 = arith.select %10, %8, %12 : vector<128x128xi1>, vector<128x128xf32>
    %14 = arith.truncf %13 : vector<128x128xf32> to vector<128x128xbf16>
    %c0_7 = arith.constant 0 : index
    %c0_8 = arith.constant 0 : index
    %15 = vector.load %arg5[%c0_7, %c0_8] : memref<128x128xbf16, #tpu.memory_space<vmem>>, vector<128x128xbf16>
    %cst_9 = arith.constant dense<0.000000e+00> : vector<128x128xf32>
    %16 = tpu.matmul %14, %15, %cst_9 {dimension_numbers = #tpu.dot_dimension_numbers<[1], [0], [0], [1], [0, 0, 1, 1], [], []>} : vector<128x128xbf16>, vector<128x128xbf16>, vector<128x128xf32> -> vector<128x128xf32>
    %c0_10 = arith.constant 0 : index
    %c0_11 = arith.constant 0 : index
    %17 = vector.load %arg6[%c0_10, %c0_11] : memref<1x128xf32, #tpu.memory_space<vmem>>, vector<1x128xf32>
    %18 = vector.broadcast %17 : vector<1x128xf32> to vector<128x128xf32>
    %19 = arith.addf %16, %18 : vector<128x128xf32>
    %c0_12 = arith.constant 0 : index
    %c0_13 = arith.constant 0 : index
    %20 = vector.load %arg2[%c0_12, %c0_13] : memref<128x128xf32, #tpu.memory_space<vmem>>, vector<128x128xf32>
    %21 = arith.addf %19, %20 : vector<128x128xf32>
    %cst_14 = arith.constant 0.000000e+00 : f32
    %22 = vector.broadcast %cst_14 : f32 to vector<128x128xf32>
    %23 = arith.cmpf ogt, %21, %22 : vector<128x128xf32>
    %24 = vector.broadcast %1 : f32 to vector<128x128xf32>
    %25 = arith.mulf %24, %21 : vector<128x128xf32>
    %26 = arith.select %23, %21, %25 : vector<128x128xi1>, vector<128x128xf32>
    %c0_15 = arith.constant 0 : index
    %c0_16 = arith.constant 0 : index
    %27 = vector.load %arg7[%c0_15, %c0_16] : memref<128x128xf32, #tpu.memory_space<vmem>>, vector<128x128xf32>
    tpu.vector_store %arg7[%c0_15, %c0_16], %26 {strides = array<i32>} : memref<128x128xf32, #tpu.memory_space<vmem>>, vector<128x128xf32>,
    return
  }
  func.func @transform_0(%arg0: i32) -> i32 {
    %c0_i32 = arith.constant 0 : i32
    %c0_i32_0 = arith.constant 0 : i32
    return %c0_i32 : i32
  }
  func.func @transform_1(%arg0: i32) -> (i32, i32) {
    %c0_i32 = arith.constant 0 : i32
    %c0_i32_0 = arith.constant 0 : i32
    return %arg0, %c0_i32 : i32, i32
  }
  func.func @transform_2(%arg0: i32) -> (i32, i32) {
    %c0_i32 = arith.constant 0 : i32
    %c0_i32_0 = arith.constant 0 : i32
    %c0_i32_1 = arith.constant 0 : i32
    return %c0_i32, %c0_i32_0 : i32, i32
  }
  func.func @transform_3(%arg0: i32) -> (i32, i32) {
    %c0_i32 = arith.constant 0 : i32
    %c0_i32_0 = arith.constant 0 : i32
    %c0_i32_1 = arith.constant 0 : i32
    return %c0_i32, %c0_i32_0 : i32, i32
  }
  func.func @transform_4(%arg0: i32) -> (i32, i32) {
    %c0_i32 = arith.constant 0 : i32
    %c0_i32_0 = arith.constant 0 : i32
    %c0_i32_1 = arith.constant 0 : i32
    return %c0_i32, %c0_i32_0 : i32, i32
  }
  func.func @transform_5(%arg0: i32) -> (i32, i32) {
    %c0_i32 = arith.constant 0 : i32
    %c0_i32_0 = arith.constant 0 : i32
    %c0_i32_1 = arith.constant 0 : i32
    return %c0_i32, %c0_i32_0 : i32, i32
  }
  func.func @transform_6(%arg0: i32) -> (i32, i32) {
    %c0_i32 = arith.constant 0 : i32
    %c0_i32_0 = arith.constant 0 : i32
    return %arg0, %c0_i32 : i32, i32
  }
}

</mosaic_0001>

<llo_original>
// kernel: tpu_custom_call.1
$region0: #{tpu_custom_call.1}
  #allocation0 [shape = 'u32[]', space=smem, size = 0x4, offset = 0x4, fixed_abs, tag = 'smem constant byte address 0x4 - core index']
  #allocation1 [shape = 'u32[144,128]{1,0:T(1,128)}', space=vmem, size = 0x12000, scoped, tag = 'internal scratch']
  %s0 = inlined_call_operand.hbm [shape: f32[2], index: 0, kind: input, shape index: {}]
  %s1 = inlined_call_operand.hbm [shape: f32[256,128], index: 1, kind: input, shape index: {}]
  %s2 = inlined_call_operand.hbm [shape: bf16[128,128], index: 2, kind: input, shape index: {}]
  %s3 = inlined_call_operand.vmem [shape: f32[1,128], index: 3, kind: input, shape index: {}]
  %s4 = inlined_call_operand.hbm [shape: bf16[128,128], index: 4, kind: input, shape index: {}]
  %s5 = inlined_call_operand.vmem [shape: f32[1,128], index: 5, kind: input, shape index: {}]
  %s6 = inlined_call_operand.hbm [shape: f32[256,128], index: 6, kind: output, shape index: {}]
  %s7 = sld [smem:[#allocation0]]
  $region73: #{tpu_custom_call.1} parent=0
    _
  %s9 = ssub.s32 1, %s7
  %s10 = scalar_select 0, %s9, %s7
  $region1: #{tpu_custom_call.1} parent=0
    #allocation2 [shape = 'u8[512]{0}', space=smem, size = 0x200, scoped, tag = 'input window, operand 0, single buffered']
    #allocation3 [shape = 's32[2]{0}', space=sflag, size = 0x8, scoped, tag = 'scoped memory for tpu_custom_call.1']
    #allocation4 [shape = 's32[2]{0}', space=sflag, size = 0x8, scoped, tag = 'scoped memory for tpu_custom_call.1']
    #allocation5 [shape = 's32[2]{0}', space=sflag, size = 0x8, scoped, tag = 'scoped memory for tpu_custom_call.1']
    #allocation6 [shape = 'u8[131072]{0}', space=vmem, size = 0x20000, scoped, tag = 'input window, operand 1']
    #allocation7 [shape = 'u8[32768]{0}', space=vmem, size = 0x8000, scoped, tag = 'input window, operand 2, single buffered']
    #allocation8 [shape = 's32[1]{0}', space=sflag, size = 0x4, scoped, tag = 'scoped memory for tpu_custom_call.1']
    #allocation9 [shape = 'u8[32768]{0}', space=vmem, size = 0x8000, scoped, tag = 'input window, operand 4, single buffered']
    #allocation10 [shape = 'u8[131072]{0}', space=vmem, size = 0x20000, scoped, tag = 'output window, operand 0']
    %11 = vsyncpa [#allocation5], 0
    %12 = vsyncpa [#allocation3], 0
    %s13 = scalar_lea.sflag [#allocation3], 1
    %14 = vsyncpa %s13, 0
    %15 = vsyncpa [#allocation8], 0
    %16 = vsyncpa [#allocation4], 0
    %s17 = scalar_lea.sflag [#allocation4], 1
    %18 = vsyncpa %s17, 0
    loop: start=0, step=1, limit=4
    $region2: #{tpu_custom_call.1} parent=1 // loop_pre_header
      _
    $region3: #{tpu_custom_call.1} parent=1 // loop_header
      %s20 = sphi 0, %s24
      %p21 = scmp.ge.s32.totalorder %s20, 4
      %s28 = sphi 0, %s28
      %s30 = sphi 0, %s28
      %s31 = sphi 0, %s30
      %s45 = sphi 0, %s31
      %s51 = sphi 0, %s53
      %s54 = sphi 0, %s51
      %s55 = sphi 0, %s54
      %s71 = sphi 0, %s55
      %s75 = sphi 0, %s75
      %s77 = sphi 0, %s75
      %s78 = sphi 0, %s77
      %s92 = sphi 0, %s78
      %s96 = sphi 0, %s96
      %s98 = sphi 0, %s96
      %s99 = sphi 0, %s98
      %s113 = sphi 0, %s99
      %s117 = sphi 0, %s117
      %s119 = sphi 0, %s117
      %s120 = sphi 0, %s119
      %s134 = sphi 0, %s120
      %s138 = sphi 0, %s138
      %s140 = sphi 0, %s138
      %s141 = sphi 0, %s140
      %s155 = sphi 0, %s141
      %s161 = sphi 0, %s163
      %s164 = sphi 0, %s161
      %s165 = sphi 0, %s164
      %s181 = sphi 0, %s165
    $region4: #{tpu_custom_call.1} parent=1 // loop_header_branch
      %23 = sbr.rel (%p21) target = $region8
    $region5: #{tpu_custom_call.1} parent=1 // loop_body
      %s25 = ssub.s32 %s20, 1
      %s26 = ssub.s32 %s20, 2
      %s27 = sadd.s32 %s20, 1
      %s29 = sadd.s32 %s28, 1
      %p32 = scmp.eq.s32.totalorder %s20, 1
      %p33 = scmp.ne.s32.totalorder %s28, %s30
      %p34 = scmp.eq.s32.totalorder %s20, 0
      %p35 = por %p33, %p34
      %p36 = scmp.ne.s32.totalorder %s28, %s30
      %p37 = scmp.eq.s32.totalorder %s25, 1
      %p38 = por %p36, %p37
      %p39 = scmp.ne.s32.totalorder %s30, %s31
      %p40 = scmp.eq.s32.totalorder %s25, 0
      %p41 = por %p39, %p40
      %p42 = scmp.ne.s32.totalorder %s30, %s31
      %p43 = scmp.eq.s32.totalorder %s26, 1
      %p44 = por %p42, %p43
      %p46 = scmp.ne.s32.totalorder %s31, %s45
      %p47 = scmp.eq.s32.totalorder %s26, 0
      %p48 = por %p46, %p47
      %s49 = ssub.s32 %s20, %s27
      %p50 = scmp.eq.s32.totalorder %s49, 0
      %s52 = sadd.s32 %s51, 1
      %s53 = scalar_select %p50, %s51, %s52
      %p56 = pneg %p50
      %p57 = scmp.eq.s32.totalorder %s20, 1
      %p58 = por %p56, %p57
      %p59 = scmp.ne.s32.totalorder %s51, %s54
      %p60 = scmp.eq.s32.totalorder %s20, 0
      %p61 = por %p59, %p60
      %p62 = scmp.ne.s32.totalorder %s51, %s54
      %p63 = scmp.eq.s32.totalorder %s25, 1
      %p64 = por %p62, %p63
      %p65 = scmp.ne.s32.totalorder %s54, %s55
      %p66 = scmp.eq.s32.totalorder %s25, 0
      %p67 = por %p65, %p66
      %p68 = scmp.ne.s32.totalorder %s54, %s55
      %p69 = scmp.eq.s32.totalorder %s26, 1
      %p70 = por %p68, %p69
      %p72 = scmp.ne.s32.totalorder %s55, %s71
      %p73 = scmp.eq.s32.totalorder %s26, 0
      %p74 = por %p72, %p73
      %s76 = sadd.s32 %s75, 1
      %p79 = scmp.eq.s32.totalorder %s20, 1
      %p80 = scmp.ne.s32.totalorder %s75, %s77
      %p81 = scmp.eq.s32.totalorder %s20, 0
      %p82 = por %p80, %p81
      %p83 = scmp.ne.s32.totalorder %s75, %s77
      %p84 = scmp.eq.s32.totalorder %s25, 1
      %p85 = por %p83, %p84
      %p86 = scmp.ne.s32.totalorder %s77, %s78
      %p87 = scmp.eq.s32.totalorder %s25, 0
      %p88 = por %p86, %p87
      %p89 = scmp.ne.s32.totalorder %s77, %s78
      %p90 = scmp.eq.s32.totalorder %s26, 1
      %p91 = por %p89, %p90
      %p93 = scmp.ne.s32.totalorder %s78, %s92
      %p94 = scmp.eq.s32.totalorder %s26, 0
      %p95 = por %p93, %p94
      %s97 = sadd.s32 %s96, 1
      %p100 = scmp.eq.s32.totalorder %s20, 1
      %p101 = scmp.ne.s32.totalorder %s96, %s98
      %p102 = scmp.eq.s32.totalorder %s20, 0
      %p103 = por %p101, %p102
      %p104 = scmp.ne.s32.totalorder %s96, %s98
      %p105 = scmp.eq.s32.totalorder %s25, 1
      %p106 = por %p104, %p105
      %p107 = scmp.ne.s32.totalorder %s98, %s99
      %p108 = scmp.eq.s32.totalorder %s25, 0
      %p109 = por %p107, %p108
      %p110 = scmp.ne.s32.totalorder %s98, %s99
      %p111 = scmp.eq.s32.totalorder %s26, 1
      %p112 = por %p110, %p111
      %p114 = scmp.ne.s32.totalorder %s99, %s113
      %p115 = scmp.eq.s32.totalorder %s26, 0
      %p116 = por %p114, %p115
      %s118 = sadd.s32 %s117, 1
      %p121 = scmp.eq.s32.totalorder %s20, 1
      %p122 = scmp.ne.s32.totalorder %s117, %s119
      %p123 = scmp.eq.s32.totalorder %s20, 0
      %p124 = por %p122, %p123
      %p125 = scmp.ne.s32.totalorder %s117, %s119
      %p126 = scmp.eq.s32.totalorder %s25, 1
      %p127 = por %p125, %p126
      %p128 = scmp.ne.s32.totalorder %s119, %s120
      %p129 = scmp.eq.s32.totalorder %s25, 0
      %p130 = por %p128, %p129
      %p131 = scmp.ne.s32.totalorder %s119, %s120
      %p132 = scmp.eq.s32.totalorder %s26, 1
      %p133 = por %p131, %p132
      %p135 = scmp.ne.s32.totalorder %s120, %s134
      %p136 = scmp.eq.s32.totalorder %s26, 0
      %p137 = por %p135, %p136
      %s139 = sadd.s32 %s138, 1
      %p142 = scmp.eq.s32.totalorder %s20, 1
      %p143 = scmp.ne.s32.totalorder %s138, %s140
      %p144 = scmp.eq.s32.totalorder %s20, 0
      %p145 = por %p143, %p144
      %p146 = scmp.ne.s32.totalorder %s138, %s140
      %p147 = scmp.eq.s32.totalorder %s25, 1
      %p148 = por %p146, %p147
      %p149 = scmp.ne.s32.totalorder %s140, %s141
      %p150 = scmp.eq.s32.totalorder %s25, 0
      %p151 = por %p149, %p150
      %p152 = scmp.ne.s32.totalorder %s140, %s141
      %p153 = scmp.eq.s32.totalorder %s26, 1
      %p154 = por %p152, %p153
      %p156 = scmp.ne.s32.totalorder %s141, %s155
      %p157 = scmp.eq.s32.totalorder %s26, 0
      %p158 = por %p156, %p157
      %s159 = ssub.s32 %s20, %s27
      %p160 = scmp.eq.s32.totalorder %s159, 0
      %s162 = sadd.s32 %s161, 1
      %s163 = scalar_select %p160, %s161, %s162
      %p166 = pneg %p160
      %p167 = scmp.eq.s32.totalorder %s20, 1
      %p168 = por %p166, %p167
      %p169 = scmp.ne.s32.totalorder %s161, %s164
      %p170 = scmp.eq.s32.totalorder %s20, 0
      %p171 = por %p169, %p170
      %p172 = scmp.ne.s32.totalorder %s161, %s164
      %p173 = scmp.eq.s32.totalorder %s25, 1
      %p174 = por %p172, %p173
      %p175 = scmp.ne.s32.totalorder %s164, %s165
      %p176 = scmp.eq.s32.totalorder %s25, 0
      %p177 = por %p175, %p176
      %p178 = scmp.ne.s32.totalorder %s164, %s165
      %p179 = scmp.eq.s32.totalorder %s26, 1
      %p180 = por %p178, %p179
      %p182 = scmp.ne.s32.totalorder %s165, %s181
      %p183 = scmp.eq.s32.totalorder %s26, 0
      %p184 = por %p182, %p183
      %p185 = scmp.le.s32.totalorder 1, %s20
      %p186 = scmp.lt.s32.totalorder %s20, 3
      %p187 = pnand %p185, %p186
      %p188 = pneg %p187
      // Predicated region
      $region9: #{tpu_custom_call.1} parent=5 // pred_check
        _
      $region10: #{tpu_custom_call.1} parent=5 // pred_check_branch
        %190 = sbr.rel (%p187) target = $region12
      $region11: #{tpu_custom_call.1} parent=5 // pred_region
        %s191 = ssub.s32 %s20, 1
        // Predicated region
        $region13: #{tpu_custom_call.1} parent=11 // pred_check
          %p192 = pneg %p41
        $region14: #{tpu_custom_call.1} parent=11 // pred_check_branch
          %194 = sbr.rel (%p192) target = $region16
        $region15: #{tpu_custom_call.1} parent=11 // pred_region
          %s196 = ssub.s32 16, 16
          %197 = vsyncadd [#allocation5], %s196
          %200 = dma.hbm_to_smem %s0, 16, [#allocation2], [#allocation5]
        $region16: #{tpu_custom_call.1} parent=11 // pred_fallthru
          _
        // Predicated region
        $region17: #{tpu_custom_call.1} parent=11 // pred_check
          %p201 = pneg %p88
        $region18: #{tpu_custom_call.1} parent=11 // pred_check_branch
          %203 = sbr.rel (%p201) target = $region20
        $region19: #{tpu_custom_call.1} parent=11 // pred_region
          %s205 = ssub.s32 1024, 1024
          %206 = vsyncadd [#allocation8], %s205
          %s207 = sshll.u32 [#allocation7], 4
          %s208 = int_to_ptr.vmem [resolvable:$true] %s207
          %213 = dma.hbm_to_vmem [thread:$0]  %s2, 1024, %s208, [#allocation8], 64, 64, 4
        $region20: #{tpu_custom_call.1} parent=11 // pred_fallthru
          _
        // Predicated region
        $region21: #{tpu_custom_call.1} parent=11 // pred_check
          %p214 = pneg %p109
        $region22: #{tpu_custom_call.1} parent=11 // pred_check_branch
          %216 = sbr.rel (%p214) target = $region24
        $region23: #{tpu_custom_call.1} parent=11 // pred_region
          _
        $region24: #{tpu_custom_call.1} parent=11 // pred_fallthru
          _
        // Predicated region
        $region25: #{tpu_custom_call.1} parent=11 // pred_check
          %p217 = pneg %p130
        $region26: #{tpu_custom_call.1} parent=11 // pred_check_branch
          %219 = sbr.rel (%p217) target = $region28
        $region27: #{tpu_custom_call.1} parent=11 // pred_region
          %s221 = ssub.s32 1024, 1024
          %222 = vsyncadd [#allocation8], %s221
          %s223 = sshll.u32 [#allocation9], 4
          %s224 = int_to_ptr.vmem [resolvable:$true] %s223
          %229 = dma.hbm_to_vmem [thread:$0]  %s4, 1024, %s224, [#allocation8], 64, 64, 4
        $region28: #{tpu_custom_call.1} parent=11 // pred_fallthru
          _
        // Predicated region
        $region29: #{tpu_custom_call.1} parent=11 // pred_check
          %p230 = pneg %p151
        $region30: #{tpu_custom_call.1} parent=11 // pred_check_branch
          %232 = sbr.rel (%p230) target = $region32
        $region31: #{tpu_custom_call.1} parent=11 // pred_region
          _
        $region32: #{tpu_custom_call.1} parent=11 // pred_fallthru
          _
      $region12: #{tpu_custom_call.1} parent=5 // pred_fallthru
        _
      %p233 = scmp.lt.s32.totalorder %s20, 2
      // Predicated region
      $region33: #{tpu_custom_call.1} parent=5 // pred_check
        %p234 = pneg %p233
      $region34: #{tpu_custom_call.1} parent=5 // pred_check_branch
        %236 = sbr.rel (%p234) target = $region36
      $region35: #{tpu_custom_call.1} parent=5 // pred_region
        // Predicated region
        $region37: #{tpu_custom_call.1} parent=35 // pred_check
          %p237 = pneg %p61
        $region38: #{tpu_custom_call.1} parent=35 // pred_check_branch
          %239 = sbr.rel (%p237) target = $region40
        $region39: #{tpu_custom_call.1} parent=35 // pred_region
          %s240 = sand.u32 %s51, 1
          %s241 = scalar_lea.sflag [#allocation3], %s240
          %s242 = sand.u32 %s51, 1
          %s243 = smul.addr %s242, 128
          %s244 = scalar_lea.vmem [#allocation6], %s243
          %s245 = smul.u32 16, %s20
          %s247 = ssub.s32 2048, 2048
          %248 = vsyncadd %s241, %s247
          %s249 = smul.addr %s245, 128
          %s250 = scalar_lea.hbm %s1, %s249
          %s251 = sshll.u32 %s244, 4
          %s252 = int_to_ptr.vmem [resolvable:$true] %s251
          %257 = dma.hbm_to_vmem [thread:$0]  %s250, 2048, %s252, %s241, 128, 128, 8
        $region40: #{tpu_custom_call.1} parent=35 // pred_fallthru
          _
      $region36: #{tpu_custom_call.1} parent=5 // pred_fallthru
        _
      %p258 = scmp.le.s32.totalorder 1, %s20
      %p259 = scmp.lt.s32.totalorder %s20, 3
      %p260 = pnand %p258, %p259
      %p261 = pneg %p260
      // Predicated region
      $region41: #{tpu_custom_call.1} parent=5 // pred_check
        _
      $region42: #{tpu_custom_call.1} parent=5 // pred_check_branch
        %263 = sbr.rel (%p260) target = $region44
      $region43: #{tpu_custom_call.1} parent=5 // pred_region
        %s264 = ssub.s32 %s20, 1
        // Predicated region
        $region45: #{tpu_custom_call.1} parent=43 // pred_check
          %p265 = pneg %p41
        $region46: #{tpu_custom_call.1} parent=43 // pred_check_branch
          %267 = sbr.rel (%p265) target = $region48
        $region47: #{tpu_custom_call.1} parent=43 // pred_region
          %268 = dma.done [#allocation5], 16
        $region48: #{tpu_custom_call.1} parent=43 // pred_fallthru
          _
        %s269 = sand.u32 %s54, 1
        %s270 = scalar_lea.sflag [#allocation3], %s269
        %s271 = sand.u32 %s54, 1
        %s272 = smul.addr %s271, 128
        %s273 = scalar_lea.vmem [#allocation6], %s272
        // Predicated region
        $region49: #{tpu_custom_call.1} parent=43 // pred_check
          %p274 = pneg %p67
        $region50: #{tpu_custom_call.1} parent=43 // pred_check_branch
          %276 = sbr.rel (%p274) target = $region52
        $region51: #{tpu_custom_call.1} parent=43 // pred_region
          %277 = dma.done %s270, 2048
        $region52: #{tpu_custom_call.1} parent=43 // pred_fallthru
          _
        // Predicated region
        $region53: #{tpu_custom_call.1} parent=43 // pred_check
          %p278 = pneg %p88
        $region54: #{tpu_custom_call.1} parent=43 // pred_check_branch
          %280 = sbr.rel (%p278) target = $region56
        $region55: #{tpu_custom_call.1} parent=43 // pred_region
          %281 = dma.done [#allocation8], 1024
        $region56: #{tpu_custom_call.1} parent=43 // pred_fallthru
          _
        // Predicated region
        $region57: #{tpu_custom_call.1} parent=43 // pred_check
          %p282 = pneg %p130
        $region58: #{tpu_custom_call.1} parent=43 // pred_check_branch
          %284 = sbr.rel (%p282) target = $region60
        $region59: #{tpu_custom_call.1} parent=43 // pred_region
          %285 = dma.done [#allocation8], 1024
        $region60: #{tpu_custom_call.1} parent=43 // pred_fallthru
          _
        %286 = sfence
        %p287 = pneg %p41
        %p288 = pneg %p38
        %s289 = sand.u32 %s54, 1
        %s290 = scalar_lea.sflag [#allocation3], %s289
        %s291 = sand.u32 %s54, 1
        %s292 = smul.addr %s291, 128
        %s293 = scalar_lea.vmem [#allocation6], %s292
        %p294 = pneg %p67
        %p295 = pneg %p64
        %p296 = pneg %p88
        %p297 = pneg %p85
        %p298 = pneg %p109
        %p299 = pneg %p106
        %p300 = pneg %p130
        %p301 = pneg %p127
        %p302 = pneg %p151
        %p303 = pneg %p148
        %p304 = pneg %p177
        %p305 = pneg %p174
        %s306 = sand.u32 %s164, 1
        %s307 = scalar_lea.sflag [#allocation4], %s306
        %s308 = sand.u32 %s164, 1
        %s309 = smul.addr %s308, 128
        %s310 = scalar_lea.vmem [#allocation10], %s309
        %s311 = smul.u32 16, %s25
        %s312 = smul.u32 16, %s25
        %s314 = sld [smem:[#allocation2]]
        %s315 = sld [smem:[#allocation2 + $0x1]]
        %v316 = vld [vmem:[%s273] sm:$0xff]
        %v317 = vld [vmem:[%s273 + $0x8] sm:$0xff]
        %v318 = vld [vmem:[%s273 + $0x10] sm:$0xff]
        %v319 = vld [vmem:[%s273 + $0x18] sm:$0xff]
        %v320 = vld [vmem:[%s273 + $0x20] sm:$0xff]
        %v321 = vld [vmem:[%s273 + $0x28] sm:$0xff]
        %v322 = vld [vmem:[%s273 + $0x30] sm:$0xff]
        %v323 = vld [vmem:[%s273 + $0x38] sm:$0xff]
        %v324 = vld [vmem:[%s273 + $0x40] sm:$0xff]
        %v325 = vld [vmem:[%s273 + $0x48] sm:$0xff]
        %v326 = vld [vmem:[%s273 + $0x50] sm:$0xff]
        %v327 = vld [vmem:[%s273 + $0x58] sm:$0xff]
        %v328 = vld [vmem:[%s273 + $0x60] sm:$0xff]
        %v329 = vld [vmem:[%s273 + $0x68] sm:$0xff]
        %v330 = vld [vmem:[%s273 + $0x70] sm:$0xff]
        %v331 = vld [vmem:[%s273 + $0x78] sm:$0xff]
        %v332 = vpack.c.bf16 %v317, %v316
        %v333 = vpack.c.bf16 %v319, %v318
        %v334 = vpack.c.bf16 %v321, %v320
        %v335 = vpack.c.bf16 %v323, %v322
        %v336 = vpack.c.bf16 %v325, %v324
        %v337 = vpack.c.bf16 %v327, %v326
        %v338 = vpack.c.bf16 %v329, %v328
        %v339 = vpack.c.bf16 %v331, %v330
        %v340 = vld [vmem:[#allocation7] sm:$0xf]
        %v341 = vld [vmem:[#allocation7 + $0x4] sm:$0xf]
        %v342 = vld [vmem:[#allocation7 + $0x8] sm:$0xf]
        %v343 = vld [vmem:[#allocation7 + $0xc] sm:$0xf]
        %v344 = vld [vmem:[#allocation7 + $0x10] sm:$0xf]
        %v345 = vld [vmem:[#allocation7 + $0x14] sm:$0xf]
        %v346 = vld [vmem:[#allocation7 + $0x18] sm:$0xf]
        %v347 = vld [vmem:[#allocation7 + $0x1c] sm:$0xf]
        %v348 = vld [vmem:[#allocation7 + $0x20] sm:$0xf]
        %v349 = vld [vmem:[#allocation7 + $0x24] sm:$0xf]
        %v350 = vld [vmem:[#allocation7 + $0x28] sm:$0xf]
        %v351 = vld [vmem:[#allocation7 + $0x2c] sm:$0xf]
        %v352 = vld [vmem:[#allocation7 + $0x30] sm:$0xf]
        %v353 = vld [vmem:[#allocation7 + $0x34] sm:$0xf]
        %v354 = vld [vmem:[#allocation7 + $0x38] sm:$0xf]
        %v355 = vld [vmem:[#allocation7 + $0x3c] sm:$0xf]
        %v356 = vld [vmem:[%s3] sm:$0x1]
        %v358 = vlaneseq
        %v359 = vshrl.u32 %v358, 7
        %v360 = vsub.s32 0, %v359
        %v361 = vrot.slane %v356, %v360
        %v379 = vunpack.c.l.b16 %v340
        %v380 = vunpack.c.l.b16 %v341
        %v381 = vunpack.c.l.b16 %v342
        %v382 = vunpack.c.l.b16 %v343
        %v383 = vunpack.c.l.b16 %v344
        %v384 = vunpack.c.l.b16 %v345
        %v385 = vunpack.c.l.b16 %v346
        %v386 = vunpack.c.l.b16 %v347
        %v387 = vunpack.c.l.b16 %v348
        %v388 = vunpack.c.l.b16 %v349
        %v389 = vunpack.c.l.b16 %v350
        %v390 = vunpack.c.l.b16 %v351
        %v391 = vunpack.c.l.b16 %v352
        %v392 = vunpack.c.l.b16 %v353
        %v393 = vunpack.c.l.b16 %v354
        %v394 = vunpack.c.l.b16 %v355
        %v395 = vpack.c.b16 %v380, %v379
        %v396 = vpack.c.b16 %v382, %v381
        %v397 = vpack.c.b16 %v384, %v383
        %v398 = vpack.c.b16 %v386, %v385
        %v399 = vpack.c.b16 %v388, %v387
        %v400 = vpack.c.b16 %v390, %v389
        %v401 = vpack.c.b16 %v392, %v391
        %v402 = vpack.c.b16 %v394, %v393
        %411 = vmatprep.subr.bf16.mxu0 0
        %412 = vmatpush1.bf16.msra.mxu0 %v395
        %413 = vmatprep.subr.bf16.mxu0 0
        %414 = vmatpush1.bf16.msra.mxu0 %v396
        %415 = vmatprep.subr.bf16.mxu0 0
        %416 = vmatpush1.bf16.msra.mxu0 %v397
        %417 = vmatprep.subr.bf16.mxu0 0
        %418 = vmatpush1.bf16.msra.mxu0 %v398
        %419 = vmatprep.subr.bf16.mxu0 0
        %420 = vmatpush1.bf16.msra.mxu0 %v399
        %421 = vmatprep.subr.bf16.mxu0 0
        %422 = vmatpush1.bf16.msra.mxu0 %v400
        %423 = vmatprep.subr.bf16.mxu0 0
        %424 = vmatpush1.bf16.msra.mxu0 %v401
        %425 = vmatprep.subr.bf16.mxu0 0
        %426 = vmatpush1.bf16.msra.mxu0 %v402
        %427 = vmatprep.subr.bf16.mxu0 0
        %428 = vmatpush1.bf16.msra.mxu0 0
        %429 = vmatprep.subr.bf16.mxu0 0
        %430 = vmatpush1.bf16.msra.mxu0 0
        %431 = vmatprep.subr.bf16.mxu0 0
        %432 = vmatpush1.bf16.msra.mxu0 0
        %433 = vmatprep.subr.bf16.mxu0 0
        %434 = vmatpush1.bf16.msra.mxu0 0
        %435 = vmatprep.subr.bf16.mxu0 0
        %436 = vmatpush1.bf16.msra.mxu0 0
        %437 = vmatprep.subr.bf16.mxu0 0
        %438 = vmatpush1.bf16.msra.mxu0 0
        %439 = vmatprep.subr.bf16.mxu0 0
        %440 = vmatpush1.bf16.msra.mxu0 0
        %441 = vmatprep.subr.bf16.mxu0 0
        %442 = vmatpush1.bf16.msra.mxu0 0
        %443 = vmatprep.mubr.bf16.mxu0 0
        %444 = vmatmul.mubr.bf16.gmra.mrb[0].mxu0 %v332
        %v445 = vpop.f32.mrb[0].mxu0
        %v446 = vadd.f32 %v361, %v445
        %v447 = vpop.f32.mrb[0].mxu0
        %v448 = vpop.f32.mrb[0].mxu0
        %v449 = vadd.f32 %v361, %v448
        %v450 = vpop.f32.mrb[0].mxu0
        %451 = vmatprep.mubr.bf16.mxu0 0
        %452 = vmatmul.mubr.bf16.gmra.mrb[0].mxu0 %v333
        %v453 = vpop.f32.mrb[0].mxu0
        %v454 = vadd.f32 %v361, %v453
        %v455 = vpop.f32.mrb[0].mxu0
        %v456 = vpop.f32.mrb[0].mxu0
        %v457 = vadd.f32 %v361, %v456
        %v458 = vpop.f32.mrb[0].mxu0
        %459 = vmatprep.mubr.bf16.mxu0 0
        %460 = vmatmul.mubr.bf16.gmra.mrb[0].mxu0 %v334
        %v461 = vpop.f32.mrb[0].mxu0
        %v462 = vadd.f32 %v361, %v461
        %v463 = vpop.f32.mrb[0].mxu0
        %v464 = vpop.f32.mrb[0].mxu0
        %v465 = vadd.f32 %v361, %v464
        %v466 = vpop.f32.mrb[0].mxu0
        %467 = vmatprep.mubr.bf16.mxu0 0
        %468 = vmatmul.mubr.bf16.gmra.mrb[0].mxu0 %v335
        %v469 = vpop.f32.mrb[0].mxu0
        %v470 = vadd.f32 %v361, %v469
        %v471 = vpop.f32.mrb[0].mxu0
        %v472 = vpop.f32.mrb[0].mxu0
        %v473 = vadd.f32 %v361, %v472
        %v474 = vpop.f32.mrb[0].mxu0
        %475 = vmatprep.mubr.bf16.mxu0 0
        %476 = vmatmul.mubr.bf16.gmra.mrb[0].mxu0 %v336
        %v477 = vpop.f32.mrb[0].mxu0
        %v478 = vadd.f32 %v361, %v477
        %v479 = vpop.f32.mrb[0].mxu0
        %v480 = vpop.f32.mrb[0].mxu0
        %v481 = vadd.f32 %v361, %v480
        %v482 = vpop.f32.mrb[0].mxu0
        %483 = vmatprep.mubr.bf16.mxu0 0
        %484 = vmatmul.mubr.bf16.gmra.mrb[0].mxu0 %v337
        %v485 = vpop.f32.mrb[0].mxu0
        %v486 = vadd.f32 %v361, %v485
        %v487 = vpop.f32.mrb[0].mxu0
        %v488 = vpop.f32.mrb[0].mxu0
        %v489 = vadd.f32 %v361, %v488
        %v490 = vpop.f32.mrb[0].mxu0
        %491 = vmatprep.mubr.bf16.mxu0 0
        %492 = vmatmul.mubr.bf16.gmra.mrb[0].mxu0 %v338
        %v493 = vpop.f32.mrb[0].mxu0
        %v494 = vadd.f32 %v361, %v493
        %v495 = vpop.f32.mrb[0].mxu0
        %v496 = vpop.f32.mrb[0].mxu0
        %v497 = vadd.f32 %v361, %v496
        %v498 = vpop.f32.mrb[0].mxu0
        %499 = vmatprep.mubr.bf16.mxu0 0
        %500 = vmatmul.mubr.bf16.gmra.mrb[0].mxu0 %v339
        %v501 = vpop.f32.mrb[0].mxu0
        %v502 = vadd.f32 %v361, %v501
        %v503 = vpop.f32.mrb[0].mxu0
        %v504 = vpop.f32.mrb[0].mxu0
        %v505 = vadd.f32 %v361, %v504
        %v506 = vpop.f32.mrb[0].mxu0
        %507 = vdwg.mxu0
        %vm508 = vcmp.gt.f32.partialorder %v446, 0.0
        %vm509 = vcmp.gt.f32.partialorder %v449, 0.0
        %vm510 = vcmp.gt.f32.partialorder %v454, 0.0
        %vm511 = vcmp.gt.f32.partialorder %v457, 0.0
        %vm512 = vcmp.gt.f32.partialorder %v462, 0.0
        %vm513 = vcmp.gt.f32.partialorder %v465, 0.0
        %vm514 = vcmp.gt.f32.partialorder %v470, 0.0
        %vm515 = vcmp.gt.f32.partialorder %v473, 0.0
        %vm516 = vcmp.gt.f32.partialorder %v478, 0.0
        %vm517 = vcmp.gt.f32.partialorder %v481, 0.0
        %vm518 = vcmp.gt.f32.partialorder %v486, 0.0
        %vm519 = vcmp.gt.f32.partialorder %v489, 0.0
        %vm520 = vcmp.gt.f32.partialorder %v494, 0.0
        %vm521 = vcmp.gt.f32.partialorder %v497, 0.0
        %vm522 = vcmp.gt.f32.partialorder %v502, 0.0
        %vm523 = vcmp.gt.f32.partialorder %v505, 0.0
        %v524 = vstv %s314
        %v525 = vmul.f32 %v524, %v446
        %v526 = vmul.f32 %v524, %v449
        %v527 = vmul.f32 %v524, %v454
        %v528 = vmul.f32 %v524, %v457
        %v529 = vmul.f32 %v524, %v462
        %v530 = vmul.f32 %v524, %v465
        %v531 = vmul.f32 %v524, %v470
        %v532 = vmul.f32 %v524, %v473
        %v533 = vmul.f32 %v524, %v478
        %v534 = vmul.f32 %v524, %v481
        %v535 = vmul.f32 %v524, %v486
        %v536 = vmul.f32 %v524, %v489
        %v537 = vmul.f32 %v524, %v494
        %v538 = vmul.f32 %v524, %v497
        %v539 = vmul.f32 %v524, %v502
        %v540 = vmul.f32 %v524, %v505
        %v541 = vsel %vm508, %v446, %v525
        %v542 = vsel %vm509, %v449, %v526
        %v543 = vsel %vm510, %v454, %v527
        %v544 = vsel %vm511, %v457, %v528
        %v545 = vsel %vm512, %v462, %v529
        %v546 = vsel %vm513, %v465, %v530
        %v547 = vsel %vm514, %v470, %v531
        %v548 = vsel %vm515, %v473, %v532
        %v549 = vsel %vm516, %v478, %v533
        %v550 = vsel %vm517, %v481, %v534
        %v551 = vsel %vm518, %v486, %v535
        %v552 = vsel %vm519, %v489, %v536
        %v553 = vsel %vm520, %v494, %v537
        %v554 = vsel %vm521, %v497, %v538
        %v555 = vsel %vm522, %v502, %v539
        %v556 = vsel %vm523, %v505, %v540
        %v557 = vpack.c.bf16 %v542, %v541
        %v558 = vpack.c.bf16 %v544, %v543
        %v559 = vpack.c.bf16 %v546, %v545
        %v560 = vpack.c.bf16 %v548, %v547
        %v561 = vpack.c.bf16 %v550, %v549
        %v562 = vpack.c.bf16 %v552, %v551
        %v563 = vpack.c.bf16 %v554, %v553
        %v564 = vpack.c.bf16 %v556, %v555
        %v565 = vld [vmem:[#allocation9] sm:$0xf]
        %v566 = vld [vmem:[#allocation9 + $0x4] sm:$0xf]
        %v567 = vld [vmem:[#allocation9 + $0x8] sm:$0xf]
        %v568 = vld [vmem:[#allocation9 + $0xc] sm:$0xf]
        %v569 = vld [vmem:[#allocation9 + $0x10] sm:$0xf]
        %v570 = vld [vmem:[#allocation9 + $0x14] sm:$0xf]
        %v571 = vld [vmem:[#allocation9 + $0x18] sm:$0xf]
        %v572 = vld [vmem:[#allocation9 + $0x1c] sm:$0xf]
        %v573 = vld [vmem:[#allocation9 + $0x20] sm:$0xf]
        %v574 = vld [vmem:[#allocation9 + $0x24] sm:$0xf]
        %v575 = vld [vmem:[#allocation9 + $0x28] sm:$0xf]
        %v576 = vld [vmem:[#allocation9 + $0x2c] sm:$0xf]
        %v577 = vld [vmem:[#allocation9 + $0x30] sm:$0xf]
        %v578 = vld [vmem:[#allocation9 + $0x34] sm:$0xf]
        %v579 = vld [vmem:[#allocation9 + $0x38] sm:$0xf]
        %v580 = vld [vmem:[#allocation9 + $0x3c] sm:$0xf]
        %v581 = vld [vmem:[%s5] sm:$0x1]
        %v583 = vlaneseq
        %v584 = vshrl.u32 %v583, 7
        %v585 = vsub.s32 0, %v584
        %v586 = vrot.slane %v581, %v585
        %v604 = vunpack.c.l.b16 %v565
        %v605 = vunpack.c.l.b16 %v566
        %v606 = vunpack.c.l.b16 %v567
        %v607 = vunpack.c.l.b16 %v568
        %v608 = vunpack.c.l.b16 %v569
        %v609 = vunpack.c.l.b16 %v570
        %v610 = vunpack.c.l.b16 %v571
        %v611 = vunpack.c.l.b16 %v572
        %v612 = vunpack.c.l.b16 %v573
        %v613 = vunpack.c.l.b16 %v574
        %v614 = vunpack.c.l.b16 %v575
        %v615 = vunpack.c.l.b16 %v576
        %v616 = vunpack.c.l.b16 %v577
        %v617 = vunpack.c.l.b16 %v578
        %v618 = vunpack.c.l.b16 %v579
        %v619 = vunpack.c.l.b16 %v580
        %v620 = vpack.c.b16 %v605, %v604
        %v621 = vpack.c.b16 %v607, %v606
        %v622 = vpack.c.b16 %v609, %v608
        %v623 = vpack.c.b16 %v611, %v610
        %v624 = vpack.c.b16 %v613, %v612
        %v625 = vpack.c.b16 %v615, %v614
        %v626 = vpack.c.b16 %v617, %v616
        %v627 = vpack.c.b16 %v619, %v618
        %636 = vmatprep.subr.bf16.mxu0 0
        %637 = vmatpush1.bf16.msra.mxu0 %v620
        %638 = vmatprep.subr.bf16.mxu0 0
        %639 = vmatpush1.bf16.msra.mxu0 %v621
        %640 = vmatprep.subr.bf16.mxu0 0
        %641 = vmatpush1.bf16.msra.mxu0 %v622
        %642 = vmatprep.subr.bf16.mxu0 0
        %643 = vmatpush1.bf16.msra.mxu0 %v623
        %644 = vmatprep.subr.bf16.mxu0 0
        %645 = vmatpush1.bf16.msra.mxu0 %v624
        %646 = vmatprep.subr.bf16.mxu0 0
        %647 = vmatpush1.bf16.msra.mxu0 %v625
        %648 = vmatprep.subr.bf16.mxu0 0
        %649 = vmatpush1.bf16.msra.mxu0 %v626
        %650 = vmatprep.subr.bf16.mxu0 0
        %651 = vmatpush1.bf16.msra.mxu0 %v627
        %652 = vmatprep.subr.bf16.mxu0 0
        %653 = vmatpush1.bf16.msra.mxu0 0
        %654 = vmatprep.subr.bf16.mxu0 0
        %655 = vmatpush1.bf16.msra.mxu0 0
        %656 = vmatprep.subr.bf16.mxu0 0
        %657 = vmatpush1.bf16.msra.mxu0 0
        %658 = vmatprep.subr.bf16.mxu0 0
        %659 = vmatpush1.bf16.msra.mxu0 0
        %660 = vmatprep.subr.bf16.mxu0 0
        %661 = vmatpush1.bf16.msra.mxu0 0
        %662 = vmatprep.subr.bf16.mxu0 0
        %663 = vmatpush1.bf16.msra.mxu0 0
        %664 = vmatprep.subr.bf16.mxu0 0
        %665 = vmatpush1.bf16.msra.mxu0 0
        %666 = vmatprep.subr.bf16.mxu0 0
        %667 = vmatpush1.bf16.msra.mxu0 0
        %668 = vmatprep.mubr.bf16.mxu0 0
        %669 = vmatmul.mubr.bf16.gmra.mrb[0].mxu0 %v557
        %v670 = vpop.f32.mrb[0].mxu0
        %v671 = vadd.f32 %v586, %v670
        %v672 = vpop.f32.mrb[0].mxu0
        %v673 = vpop.f32.mrb[0].mxu0
        %v674 = vadd.f32 %v586, %v673
        %v675 = vpop.f32.mrb[0].mxu0
        %676 = vmatprep.mubr.bf16.mxu0 0
        %677 = vmatmul.mubr.bf16.gmra.mrb[0].mxu0 %v558
        %v678 = vpop.f32.mrb[0].mxu0
        %v679 = vadd.f32 %v586, %v678
        %v680 = vpop.f32.mrb[0].mxu0
        %v681 = vpop.f32.mrb[0].mxu0
        %v682 = vadd.f32 %v586, %v681
        %v683 = vpop.f32.mrb[0].mxu0
        %684 = vmatprep.mubr.bf16.mxu0 0
        %685 = vmatmul.mubr.bf16.gmra.mrb[0].mxu0 %v559
        %v686 = vpop.f32.mrb[0].mxu0
        %v687 = vadd.f32 %v586, %v686
        %v688 = vpop.f32.mrb[0].mxu0
        %v689 = vpop.f32.mrb[0].mxu0
        %v690 = vadd.f32 %v586, %v689
        %v691 = vpop.f32.mrb[0].mxu0
        %692 = vmatprep.mubr.bf16.mxu0 0
        %693 = vmatmul.mubr.bf16.gmra.mrb[0].mxu0 %v560
        %v694 = vpop.f32.mrb[0].mxu0
        %v695 = vadd.f32 %v586, %v694
        %v696 = vpop.f32.mrb[0].mxu0
        %v697 = vpop.f32.mrb[0].mxu0
        %v698 = vadd.f32 %v586, %v697
        %v699 = vpop.f32.mrb[0].mxu0
        %700 = vmatprep.mubr.bf16.mxu0 0
        %701 = vmatmul.mubr.bf16.gmra.mrb[0].mxu0 %v561
        %v702 = vpop.f32.mrb[0].mxu0
        %v703 = vadd.f32 %v586, %v702
        %v704 = vpop.f32.mrb[0].mxu0
        %v705 = vpop.f32.mrb[0].mxu0
        %v706 = vadd.f32 %v586, %v705
        %v707 = vpop.f32.mrb[0].mxu0
        %708 = vmatprep.mubr.bf16.mxu0 0
        %709 = vmatmul.mubr.bf16.gmra.mrb[0].mxu0 %v562
        %v710 = vpop.f32.mrb[0].mxu0
        %v711 = vadd.f32 %v586, %v710
        %v712 = vpop.f32.mrb[0].mxu0
        %v713 = vpop.f32.mrb[0].mxu0
        %v714 = vadd.f32 %v586, %v713
        %v715 = vpop.f32.mrb[0].mxu0
        %716 = vmatprep.mubr.bf16.mxu0 0
        %717 = vmatmul.mubr.bf16.gmra.mrb[0].mxu0 %v563
        %v718 = vpop.f32.mrb[0].mxu0
        %v719 = vadd.f32 %v586, %v718
        %v720 = vpop.f32.mrb[0].mxu0
        %v721 = vpop.f32.mrb[0].mxu0
        %v722 = vadd.f32 %v586, %v721
        %v723 = vpop.f32.mrb[0].mxu0
        %724 = vmatprep.mubr.bf16.mxu0 0
        %725 = vmatmul.mubr.bf16.gmra.mrb[0].mxu0 %v564
        %v726 = vpop.f32.mrb[0].mxu0
        %v727 = vadd.f32 %v586, %v726
        %v728 = vpop.f32.mrb[0].mxu0
        %v729 = vpop.f32.mrb[0].mxu0
        %v730 = vadd.f32 %v586, %v729
        %v731 = vpop.f32.mrb[0].mxu0
        %732 = vdwg.mxu0
        %v733 = vadd.f32 %v671, %v316
        %v734 = vadd.f32 %v674, %v317
        %v735 = vadd.f32 %v679, %v318
        %v736 = vadd.f32 %v682, %v319
        %v737 = vadd.f32 %v687, %v320
        %v738 = vadd.f32 %v690, %v321
        %v739 = vadd.f32 %v695, %v322
        %v740 = vadd.f32 %v698, %v323
        %v741 = vadd.f32 %v703, %v324
        %v742 = vadd.f32 %v706, %v325
        %v743 = vadd.f32 %v711, %v326
        %v744 = vadd.f32 %v714, %v327
        %v745 = vadd.f32 %v719, %v328
        %v746 = vadd.f32 %v722, %v329
        %v747 = vadd.f32 %v727, %v330
        %v748 = vadd.f32 %v730, %v331
        %vm749 = vcmp.gt.f32.partialorder %v733, 0.0
        %vm750 = vcmp.gt.f32.partialorder %v734, 0.0
        %vm751 = vcmp.gt.f32.partialorder %v735, 0.0
        %vm752 = vcmp.gt.f32.partialorder %v736, 0.0
        %vm753 = vcmp.gt.f32.partialorder %v737, 0.0
        %vm754 = vcmp.gt.f32.partialorder %v738, 0.0
        %vm755 = vcmp.gt.f32.partialorder %v739, 0.0
        %vm756 = vcmp.gt.f32.partialorder %v740, 0.0
        %vm757 = vcmp.gt.f32.partialorder %v741, 0.0
        %vm758 = vcmp.gt.f32.partialorder %v742, 0.0
        %vm759 = vcmp.gt.f32.partialorder %v743, 0.0
        %vm760 = vcmp.gt.f32.partialorder %v744, 0.0
        %vm761 = vcmp.gt.f32.partialorder %v745, 0.0
        %vm762 = vcmp.gt.f32.partialorder %v746, 0.0
        %vm763 = vcmp.gt.f32.partialorder %v747, 0.0
        %vm764 = vcmp.gt.f32.partialorder %v748, 0.0
        %v765 = vstv %s315
        %v766 = vmul.f32 %v765, %v733
        %v767 = vmul.f32 %v765, %v734
        %v768 = vmul.f32 %v765, %v735
        %v769 = vmul.f32 %v765, %v736
        %v770 = vmul.f32 %v765, %v737
        %v771 = vmul.f32 %v765, %v738
        %v772 = vmul.f32 %v765, %v739
        %v773 = vmul.f32 %v765, %v740
        %v774 = vmul.f32 %v765, %v741
        %v775 = vmul.f32 %v765, %v742
        %v776 = vmul.f32 %v765, %v743
        %v777 = vmul.f32 %v765, %v744
        %v778 = vmul.f32 %v765, %v745
        %v779 = vmul.f32 %v765, %v746
        %v780 = vmul.f32 %v765, %v747
        %v781 = vmul.f32 %v765, %v748
        %v782 = vsel %vm749, %v733, %v766
        %v783 = vsel %vm750, %v734, %v767
        %v784 = vsel %vm751, %v735, %v768
        %v785 = vsel %vm752, %v736, %v769
        %v786 = vsel %vm753, %v737, %v770
        %v787 = vsel %vm754, %v738, %v771
        %v788 = vsel %vm755, %v739, %v772
        %v789 = vsel %vm756, %v740, %v773
        %v790 = vsel %vm757, %v741, %v774
        %v791 = vsel %vm758, %v742, %v775
        %v792 = vsel %vm759, %v743, %v776
        %v793 = vsel %vm760, %v744, %v777
        %v794 = vsel %vm761, %v745, %v778
        %v795 = vsel %vm762, %v746, %v779
        %v796 = vsel %vm763, %v747, %v780
        %v797 = vsel %vm764, %v748, %v781
        %798 = vst [vmem:[%s310] sm:$0xff] %v782
        %799 = vst [vmem:[%s310 + $0x8] sm:$0xff] %v783
        %800 = vst [vmem:[%s310 + $0x10] sm:$0xff] %v784
        %801 = vst [vmem:[%s310 + $0x18] sm:$0xff] %v785
        %802 = vst [vmem:[%s310 + $0x20] sm:$0xff] %v786
        %803 = vst [vmem:[%s310 + $0x28] sm:$0xff] %v787
        %804 = vst [vmem:[%s310 + $0x30] sm:$0xff] %v788
        %805 = vst [vmem:[%s310 + $0x38] sm:$0xff] %v789
        %806 = vst [vmem:[%s310 + $0x40] sm:$0xff] %v790
        %807 = vst [vmem:[%s310 + $0x48] sm:$0xff] %v791
        %808 = vst [vmem:[%s310 + $0x50] sm:$0xff] %v792
        %809 = vst [vmem:[%s310 + $0x58] sm:$0xff] %v793
        %810 = vst [vmem:[%s310 + $0x60] sm:$0xff] %v794
        %811 = vst [vmem:[%s310 + $0x68] sm:$0xff] %v795
        %812 = vst [vmem:[%s310 + $0x70] sm:$0xff] %v796
        %813 = vst [vmem:[%s310 + $0x78] sm:$0xff] %v797
        %s814 = sand.u32 %s164, 1
        %s815 = scalar_lea.sflag [#allocation4], %s814
        %s816 = sand.u32 %s164, 1
        %s817 = smul.addr %s816, 128
        %s818 = scalar_lea.vmem [#allocation10], %s817
        // Predicated region
        $region61: #{tpu_custom_call.1} parent=43 // pred_check
          %p819 = pneg %p174
        $region62: #{tpu_custom_call.1} parent=43 // pred_check_branch
          %821 = sbr.rel (%p819) target = $region64
        $region63: #{tpu_custom_call.1} parent=43 // pred_region
          %s822 = smul.u32 16, %s25
          %s824 = ssub.s32 2048, 2048
          %825 = vsyncadd %s815, %s824
          %s826 = smul.addr %s822, 128
          %s827 = scalar_lea.hbm %s6, %s826
          %s828 = sshll.u32 %s818, 4
          %s829 = int_to_ptr.vmem [resolvable:$true] %s828
          %834 = dma.vmem_to_hbm [thread:$0]  %s829, 2048, %s827, %s815, 128, 128, 8
        $region64: #{tpu_custom_call.1} parent=43 // pred_fallthru
          _
      $region44: #{tpu_custom_call.1} parent=5 // pred_fallthru
        _
      %p835 = scmp.le.s32.totalorder 2, %s20
      // Predicated region
      $region65: #{tpu_custom_call.1} parent=5 // pred_check
        %p836 = pneg %p835
      $region66: #{tpu_custom_call.1} parent=5 // pred_check_branch
        %838 = sbr.rel (%p836) target = $region68
      $region67: #{tpu_custom_call.1} parent=5 // pred_region
        %s839 = ssub.s32 %s20, 2
        // Predicated region
        $region69: #{tpu_custom_call.1} parent=67 // pred_check
          %p840 = pneg %p180
        $region70: #{tpu_custom_call.1} parent=67 // pred_check_branch
          %842 = sbr.rel (%p840) target = $region72
        $region71: #{tpu_custom_call.1} parent=67 // pred_region
          %s843 = sand.u32 %s165, 1
          %s844 = scalar_lea.sflag [#allocation4], %s843
          %s845 = sand.u32 %s165, 1
          %s846 = smul.addr %s845, 128
          %s847 = scalar_lea.vmem [#allocation10], %s846
          %848 = dma.done %s844, 2048
        $region72: #{tpu_custom_call.1} parent=67 // pred_fallthru
          _
      $region68: #{tpu_custom_call.1} parent=5 // pred_fallthru
        _
    $region6: #{tpu_custom_call.1} parent=1 // loop_footer
      %s24 = sadd.s32 1, %s20
    $region7: #{tpu_custom_call.1} parent=1 // loop_footer_branch
      %19 = sbr.rel target = $region3
    $region8: #{tpu_custom_call.1} parent=1 // loop_exit
      _
    %849 = vsyncpa [#allocation3], 1
    %s850 = scalar_lea.sflag [#allocation3], 1
    %851 = vsyncpa %s850, 1
    %852 = vsyncpa [#allocation8], 1
    %853 = vsyncpa [#allocation4], 1
    %s854 = scalar_lea.sflag [#allocation4], 1
    %855 = vsyncpa %s854, 1
    %856 = vsyncpa [#allocation5], 1
    %s857 = scalar_lea.sflag [#allocation5], 1
    %858 = vsyncpa %s857, 1

</llo_original>
